<compile_context>
chip_gen: v6e
topology: v6e:2x2x1
jax: 0.10.0
libtpu: 0.0.40
codegen_flags: <defaults>
</compile_context>

<pallas_src>
import jax
import jax.numpy as jnp
from jax.experimental import pallas as pl
from jax.experimental.pallas import tpu as pltpu


# ---------------------------------------------------------------- helpers
def _round_up(n, m):
    return ((n + m - 1) // m) * m


_TK_MAX = 2048  # largest single K tile before we fall back to 1024-wide tiles


# ---------------------------------------------------------------- kernel
def _matmul_bias_kernel(x_ref, w_ref, b_ref, o_ref):
    """o[b, n] = sum_k x[b, k] @ w[k, n] + bias[n].

    bf16 operands, f32 accumulation directly into the VMEM-resident output
    tile (the out-spec index is constant along the reduction axis), f32 bias
    epilogue on the last K step.
    """
    k = pl.program_id(2)

    @pl.when(k == 0)
    def _init():
        o_ref[...] = jnp.zeros_like(o_ref)

    o_ref[...] += jnp.dot(x_ref[...], w_ref[...],
                          preferred_element_type=jnp.float32)

    @pl.when(k == pl.num_programs(2) - 1)
    def _finalize():
        o_ref[...] += b_ref[...]


def _fused_matmul_bias(x_pad, w_all, b_all, tb, tn, tk):
    """One pallas_call computing x_pad @ w_all + b_all (all heads at once)."""
    b_pad, d_pad = x_pad.shape
    f_total = w_all.shape[1]
    grid = (b_pad // tb, f_total // tn, d_pad // tk)

    return pl.pallas_call(
        _matmul_bias_kernel,
        out_shape=jax.ShapeDtypeStruct((b_pad, f_total), jnp.float32),
        grid_spec=pltpu.PrefetchScalarGridSpec(
            num_scalar_prefetch=0,
            grid=grid,
            in_specs=[
                pl.BlockSpec((tb, tk), lambda b, n, k: (b, k)),   # x
                pl.BlockSpec((tk, tn), lambda b, n, k: (k, n)),   # stacked W
                pl.BlockSpec((1, tn), lambda b, n, k: (0, n)),    # stacked bias
            ],
            out_specs=pl.BlockSpec((tb, tn), lambda b, n, k: (b, n)),
        ),
        compiler_params=pltpu.CompilerParams(
            # batch / feature tiles are independent (v7x megacore);
            # K is the resident-accumulator reduction axis.
            dimension_semantics=("parallel", "parallel", "arbitrary"),
        ),
    )(x_pad, w_all, b_all)


# ---------------------------------------------------------------- extractors
class LinearFeatureExtractor:
    """Flatten(NCHW) -> Linear(C*H*W, F)."""

    def __init__(self, key, in_features, out_features):
        kw, kb = jax.random.split(key)
        scale = 1.0 / jnp.sqrt(in_features)
        self.in_features = in_features
        self.out_features = out_features
        self.w = jax.random.uniform(kw, (in_features, out_features),
                                    jnp.float32, -scale, scale)
        self.b = jax.random.uniform(kb, (1, out_features),
                                    jnp.float32, -scale, scale)

    def expanded_weight(self, hw, d):
        assert self.in_features == d, "LinearFeatureExtractor expects C*H*W inputs"
        return self.w                                        # [D, F]

    def __call__(self, x):
        return EnsembleFeatureExtractor([self]).forward_list(x)[0]


class GAPFeatureExtractor:
    """AdaptiveAvgPool2d(1) -> Flatten -> Linear(C, F)."""

    def __init__(self, key, in_channels, out_features):
        kw, kb = jax.random.split(key)
        scale = 1.0 / jnp.sqrt(in_channels)
        self.in_channels = in_channels
        self.out_features = out_features
        self.w = jax.random.uniform(kw, (in_channels, out_features),
                                    jnp.float32, -scale, scale)
        self.b = jax.random.uniform(kb, (1, out_features),
                                    jnp.float32, -scale, scale)

    def expanded_weight(self, hw, d):
        # Fold the 1/(H*W) global average pooling into the weight: row
        # c*HW + s of the expanded [D, F] matrix equals w[c] / HW, so the GAP
        # head becomes an ordinary linear head on flattened x (no selector DMA,
        # no second matmul).
        assert self.in_channels * hw == d
        return jnp.repeat(self.w / hw, hw, axis=0)           # [D, F]

    def __call__(self, x):
        return EnsembleFeatureExtractor([self]).forward_list(x)[0]


# ---------------------------------------------------------------- ensemble module
class EnsembleFeatureExtractor:
    """JAX/Pallas port of EnsembleFeatureExtractor.

    forward(x) -> Dict[int, Array] with features[i] = extractors[i](x).squeeze().
    All extractors are evaluated by ONE fused pallas_call (x read from HBM
    once, all heads share one launch).
    """

    def __init__(self, extractors):
        self.extractors = list(extractors)
        self._prepared = {}  # (C, H, W) -> stacked / padded / bf16-cast params

    # ---- one-time (per input spatial shape) weight preparation
    def _prepare(self, C, H, W):
        key = (C, H, W)
        if key in self._prepared:
            return self._prepared[key]

        hw = H * W
        d = C * hw
        tk = _round_up(d, 128) if d <= _TK_MAX else 1024
        d_pad = _round_up(d, tk)

        f_pads = [_round_up(e.out_features, 128) for e in self.extractors]
        offsets, off = [], 0
        for fp in f_pads:
            offsets.append(off)
            off += fp
        f_total = off

        w_all = jnp.zeros((d_pad, f_total), jnp.float32)
        b_all = jnp.zeros((1, f_total), jnp.float32)
        for e, o in zip(self.extractors, offsets):
            w = e.expanded_weight(hw, d)                       # [D, F] f32
            w_all = w_all.at[:d, o:o + e.out_features].set(w)
            b_all = b_all.at[:, o:o + e.out_features].set(e.b)

        # Pre-cast weights to bf16 once; biases stay f32 (f32 epilogue).
        prepared = (w_all.astype(jnp.bfloat16), b_all, d_pad, tk,
                    f_total, tuple(offsets))
        self._prepared[key] = prepared
        return prepared

    # ---- unsqueezed per-head outputs (ensemble order)
    def forward_list(self, x):
        B, C, H, W = x.shape
        d = C * H * W
        w_all, b_all, d_pad, tk, f_total, offsets = self._prepare(C, H, W)

        # Batch tiling: whole (8-rounded) batch in one block when small, else
        # 256-row MXU-sized tiles on an extra parallel axis.
        if B <= 256:
            b_pad = _round_up(max(B, 8), 8)
            tb = b_pad
        else:
            b_pad = _round_up(B, 256)
            tb = 256
        tn = 128  # per-head feature tiles; >=2 heads -> v7x gets both cores

        x_flat = x.reshape(B, d).astype(jnp.bfloat16)
        x_pad = jnp.pad(x_flat, ((0, b_pad - B), (0, d_pad - d)))

        out = _fused_matmul_bias(x_pad, w_all, b_all, tb, tn, tk)

        return [out[:B, o:o + e.out_features]
                for e, o in zip(self.extractors, offsets)]

    def __call__(self, x):
        outs = self.forward_list(x)
        return {i: jnp.squeeze(o) for i, o in enumerate(outs)}


# ---------------------------------------------------------------- main
if __name__ == "__main__":
    key = jax.random.PRNGKey(0)
    kx, k1, k2 = jax.random.split(key, 3)

    B, C, H, W = 2, 4, 16, 16
    F_OUT = 32
    x = jax.random.normal(kx, (B, C, H, W), dtype=jnp.float32)

    lin = LinearFeatureExtractor(k1, C * H * W, F_OUT)
    gap = GAPFeatureExtractor(k2, C, F_OUT)
    ensemble = EnsembleFeatureExtractor([lin, gap])

    feats = jax.block_until_ready(ensemble(x))

    # plain-JAX f32 reference check of both extractors
    ref0 = jnp.squeeze(x.reshape(B, -1) @ lin.w + lin.b)
    ref1 = jnp.squeeze(jnp.mean(x, axis=(2, 3)) @ gap.w + gap.b)
    assert feats[0].shape == (B, F_OUT) and feats[1].shape == (B, F_OUT)
    # bf16 operands with f32 accumulation -> loosened tolerance vs f32 ref.
    assert jnp.allclose(feats[0], ref0, atol=5e-2, rtol=5e-2)
    assert jnp.allclose(feats[1], ref1, atol=5e-2, rtol=5e-2)

    print("KERNEL_OK")
</pallas_src>

<mosaic_0001>
module attributes {stable_mosaic.version = 11 : i64} {
  func.func @_matmul_bias_kernel(%arg0: i32, %arg1: i32, %arg2: i32, %arg3: memref<8x1024xbf16, #tpu.memory_space<vmem>>, %arg4: memref<1024x128xbf16, #tpu.memory_space<vmem>>, %arg5: memref<1x128xf32, #tpu.memory_space<vmem>>, %arg6: memref<8x128xf32, #tpu.memory_space<vmem>>) attributes {dimension_semantics = [#tpu.dimension_semantics<parallel>, #tpu.dimension_semantics<parallel>, #tpu.dimension_semantics<arbitrary>], iteration_bounds = array<i64: 1, 2, 1>, scalar_prefetch = 0 : i64, scratch_operands = 0 : i64, tpu.core_type = #tpu.core_type<tc>, window_params = [{transform_indices = @transform_0, window_bounds = array<i64: 8, 1024>}, {transform_indices = @transform_1, window_bounds = array<i64: 1024, 128>}, {transform_indices = @transform_2, window_bounds = array<i64: 1, 128>}, {transform_indices = @transform_3, window_bounds = array<i64: 8, 128>}]} {
    %c0_i32 = arith.constant 0 : i32
    %0 = arith.cmpi eq, %arg2, %c0_i32 : i32
    %1 = arith.extui %0 : i1 to i32
    %c0_i32_0 = arith.constant 0 : i32
    %2 = arith.cmpi ne, %1, %c0_i32_0 : i32
    scf.if %2 {
      %cst_10 = arith.constant 0.000000e+00 : f32
      %12 = vector.broadcast %cst_10 : f32 to vector<8x128xf32>
      %c0_11 = arith.constant 0 : index
      %c0_12 = arith.constant 0 : index
      %13 = vector.load %arg6[%c0_11, %c0_12] : memref<8x128xf32, #tpu.memory_space<vmem>>, vector<8x128xf32>
      tpu.vector_store %arg6[%c0_11, %c0_12], %12 {strides = array<i32>} : memref<8x128xf32, #tpu.memory_space<vmem>>, vector<8x128xf32>,
    } else {
    }
    %c0 = arith.constant 0 : index
    %c0_1 = arith.constant 0 : index
    %3 = vector.load %arg6[%c0, %c0_1] : memref<8x128xf32, #tpu.memory_space<vmem>>, vector<8x128xf32>
    %c0_2 = arith.constant 0 : index
    %c0_3 = arith.constant 0 : index
    %4 = vector.load %arg3[%c0_2, %c0_3] : memref<8x1024xbf16, #tpu.memory_space<vmem>>, vector<8x1024xbf16>
    %c0_4 = arith.constant 0 : index
    %c0_5 = arith.constant 0 : index
    %5 = vector.load %arg4[%c0_4, %c0_5] : memref<1024x128xbf16, #tpu.memory_space<vmem>>, vector<1024x128xbf16>
    %cst = arith.constant dense<0.000000e+00> : vector<8x128xf32>
    %6 = tpu.matmul %4, %5, %cst {dimension_numbers = #tpu.dot_dimension_numbers<[1], [0], [0], [1], [0, 0, 1, 1], [], []>} : vector<8x1024xbf16>, vector<1024x128xbf16>, vector<8x128xf32> -> vector<8x128xf32>
    %7 = arith.addf %3, %6 : vector<8x128xf32>
    %c0_6 = arith.constant 0 : index
    %c0_7 = arith.constant 0 : index
    %8 = vector.load %arg6[%c0_6, %c0_7] : memref<8x128xf32, #tpu.memory_space<vmem>>, vector<8x128xf32>
    tpu.vector_store %arg6[%c0_6, %c0_7], %7 {strides = array<i32>} : memref<8x128xf32, #tpu.memory_space<vmem>>, vector<8x128xf32>,
    %c0_i32_8 = arith.constant 0 : i32
    %9 = arith.cmpi eq, %arg2, %c0_i32_8 : i32
    %10 = arith.extui %9 : i1 to i32
    %c0_i32_9 = arith.constant 0 : i32
    %11 = arith.cmpi ne, %10, %c0_i32_9 : i32
    scf.if %11 {
      %c0_10 = arith.constant 0 : index
      %c0_11 = arith.constant 0 : index
      %12 = vector.load %arg6[%c0_10, %c0_11] : memref<8x128xf32, #tpu.memory_space<vmem>>, vector<8x128xf32>
      %c0_12 = arith.constant 0 : index
      %c0_13 = arith.constant 0 : index
      %13 = vector.load %arg5[%c0_12, %c0_13] : memref<1x128xf32, #tpu.memory_space<vmem>>, vector<1x128xf32>
      %14 = vector.broadcast %13 : vector<1x128xf32> to vector<8x128xf32>
      %15 = arith.addf %12, %14 : vector<8x128xf32>
      %c0_14 = arith.constant 0 : index
      %c0_15 = arith.constant 0 : index
      %16 = vector.load %arg6[%c0_14, %c0_15] : memref<8x128xf32, #tpu.memory_space<vmem>>, vector<8x128xf32>
      tpu.vector_store %arg6[%c0_14, %c0_15], %15 {strides = array<i32>} : memref<8x128xf32, #tpu.memory_space<vmem>>, vector<8x128xf32>,
    } else {
    }
    return
  }
  func.func @transform_0(%arg0: i32, %arg1: i32, %arg2: i32) -> (i32, i32) {
    %c0_i32 = arith.constant 0 : i32
    return %arg0, %arg2 : i32, i32
  }
  func.func @transform_1(%arg0: i32, %arg1: i32, %arg2: i32) -> (i32, i32) {
    %c0_i32 = arith.constant 0 : i32
    return %arg2, %arg1 : i32, i32
  }
  func.func @transform_2(%arg0: i32, %arg1: i32, %arg2: i32) -> (i32, i32) {
    %c0_i32 = arith.constant 0 : i32
    %c0_i32_0 = arith.constant 0 : i32
    return %c0_i32, %arg1 : i32, i32
  }
  func.func @transform_3(%arg0: i32, %arg1: i32, %arg2: i32) -> (i32, i32) {
    %c0_i32 = arith.constant 0 : i32
    return %arg0, %arg1 : i32, i32
  }
}

</mosaic_0001>

<llo_original>
// kernel: tpu_custom_call.1
$region0: #{tpu_custom_call.1}
  #allocation0 [shape = 'u32[]', space=smem, size = 0x4, offset = 0x4, fixed_abs, tag = 'smem constant byte address 0x4 - core index']
  #allocation1 [shape = 'u32[144,128]{1,0:T(1,128)}', space=vmem, size = 0x12000, scoped, tag = 'internal scratch']
  %s0 = inlined_call_operand.hbm [shape: bf16[8,1024], index: 0, kind: input, shape index: {}]
  %s1 = inlined_call_operand.hbm [shape: bf16[1024,256], index: 1, kind: input, shape index: {}]
  %s2 = inlined_call_operand.vmem [shape: f32[1,256], index: 2, kind: input, shape index: {}]
  %s3 = inlined_call_operand.hbm [shape: f32[8,256], index: 3, kind: output, shape index: {}]
  %s4 = sld [smem:[#allocation0]]
  $region61: #{tpu_custom_call.1} parent=0
    _
  %s6 = ssub.s32 1, %s4
  %s7 = scalar_select 0, %s6, %s4
  $region1: #{tpu_custom_call.1} parent=0
    #allocation2 [shape = 'u8[16384]{0}', space=vmem, size = 0x4000, scoped, tag = 'input window, operand 0, single buffered']
    #allocation3 [shape = 's32[2]{0}', space=sflag, size = 0x8, scoped, tag = 'scoped memory for tpu_custom_call.1']
    #allocation4 [shape = 's32[2]{0}', space=sflag, size = 0x8, scoped, tag = 'scoped memory for tpu_custom_call.1']
    #allocation5 [shape = 'u8[524288]{0}', space=vmem, size = 0x80000, scoped, tag = 'input window, operand 1']
    #allocation6 [shape = 's32[2]{0}', space=sflag, size = 0x8, scoped, tag = 'scoped memory for tpu_custom_call.1']
    #allocation7 [shape = 'u8[8192]{0}', space=vmem, size = 0x2000, scoped, tag = 'output window, operand 0']
    %8 = vsyncpa [#allocation3], 0
    %9 = vsyncpa [#allocation6], 0
    %s10 = scalar_lea.sflag [#allocation6], 1
    %11 = vsyncpa %s10, 0
    %12 = vsyncpa [#allocation4], 0
    %s13 = scalar_lea.sflag [#allocation4], 1
    %14 = vsyncpa %s13, 0
    loop: start=0, step=1, limit=4
    $region2: #{tpu_custom_call.1} parent=1 // loop_pre_header
      _
    $region3: #{tpu_custom_call.1} parent=1 // loop_header
      %s16 = sphi 0, %s20
      %p17 = scmp.ge.s32.totalorder %s16, 4
      %s23 = sphi 0, %s42
      %s24 = sphi 0, %s38
      %s25 = sphi 0, %s34
      %s26 = sphi 0, %s23
      %s27 = sphi 0, %s24
      %s28 = sphi 0, %s25
      %s29 = sphi 0, %s26
      %s30 = sphi 0, %s27
      %s31 = sphi 0, %s28
      %s47 = sphi 0, %s49
      %s50 = sphi 0, %s47
      %s51 = sphi 0, %s50
      %s67 = sphi 0, %s51
      %s75 = sphi 0, %s77
      %s78 = sphi 0, %s75
      %s79 = sphi 0, %s78
      %s95 = sphi 0, %s79
      %s101 = sphi 0, %s103
      %s104 = sphi 0, %s101
      %s105 = sphi 0, %s104
      %s121 = sphi 0, %s105
      %s129 = sphi 0, %s131
      %s132 = sphi 0, %s129
      %s133 = sphi 0, %s132
      %s149 = sphi 0, %s133
    $region4: #{tpu_custom_call.1} parent=1 // loop_header_branch
      %19 = sbr.rel (%p17) target = $region8
    $region5: #{tpu_custom_call.1} parent=1 // loop_body
      %s21 = ssub.s32 %s16, 1
      %s22 = ssub.s32 %s16, 2
      %s32 = sadd.s32 1, %s25
      %p33 = scmp.ge.s32.totalorder %s32, 1
      %s34 = scalar_select %p33, 0, %s32
      %s35 = sadd.s32 1, %s24
      %s36 = scalar_select %p33, %s35, %s24
      %p37 = scmp.ge.s32.totalorder %s36, 2
      %s38 = scalar_select %p37, 0, %s36
      %s39 = sadd.s32 1, %s23
      %s40 = scalar_select %p37, %s39, %s23
      %p41 = scmp.ge.s32.totalorder %s40, 1
      %s42 = scalar_select %p41, 0, %s40
      %s43 = ssub.s32 %s23, %s42
      %s44 = ssub.s32 %s25, %s34
      %s45 = sor.u32 %s43, %s44
      %p46 = scmp.eq.s32.totalorder %s45, 0
      %s48 = sadd.s32 %s47, 1
      %s49 = scalar_select %p46, %s47, %s48
      %p52 = pneg %p46
      %p53 = scmp.eq.s32.totalorder %s16, 1
      %p54 = por %p52, %p53
      %p55 = scmp.ne.s32.totalorder %s47, %s50
      %p56 = scmp.eq.s32.totalorder %s16, 0
      %p57 = por %p55, %p56
      %p58 = scmp.ne.s32.totalorder %s47, %s50
      %p59 = scmp.eq.s32.totalorder %s21, 1
      %p60 = por %p58, %p59
      %p61 = scmp.ne.s32.totalorder %s50, %s51
      %p62 = scmp.eq.s32.totalorder %s21, 0
      %p63 = por %p61, %p62
      %p64 = scmp.ne.s32.totalorder %s50, %s51
      %p65 = scmp.eq.s32.totalorder %s22, 1
      %p66 = por %p64, %p65
      %p68 = scmp.ne.s32.totalorder %s51, %s67
      %p69 = scmp.eq.s32.totalorder %s22, 0
      %p70 = por %p68, %p69
      %s71 = ssub.s32 %s25, %s34
      %s72 = ssub.s32 %s24, %s38
      %s73 = sor.u32 %s71, %s72
      %p74 = scmp.eq.s32.totalorder %s73, 0
      %s76 = sadd.s32 %s75, 1
      %s77 = scalar_select %p74, %s75, %s76
      %p80 = pneg %p74
      %p81 = scmp.eq.s32.totalorder %s16, 1
      %p82 = por %p80, %p81
      %p83 = scmp.ne.s32.totalorder %s75, %s78
      %p84 = scmp.eq.s32.totalorder %s16, 0
      %p85 = por %p83, %p84
      %p86 = scmp.ne.s32.totalorder %s75, %s78
      %p87 = scmp.eq.s32.totalorder %s21, 1
      %p88 = por %p86, %p87
      %p89 = scmp.ne.s32.totalorder %s78, %s79
      %p90 = scmp.eq.s32.totalorder %s21, 0
      %p91 = por %p89, %p90
      %p92 = scmp.ne.s32.totalorder %s78, %s79
      %p93 = scmp.eq.s32.totalorder %s22, 1
      %p94 = por %p92, %p93
      %p96 = scmp.ne.s32.totalorder %s79, %s95
      %p97 = scmp.eq.s32.totalorder %s22, 0
      %p98 = por %p96, %p97
      %s99 = ssub.s32 %s24, %s38
      %p100 = scmp.eq.s32.totalorder %s99, 0
      %s102 = sadd.s32 %s101, 1
      %s103 = scalar_select %p100, %s101, %s102
      %p106 = pneg %p100
      %p107 = scmp.eq.s32.totalorder %s16, 1
      %p108 = por %p106, %p107
      %p109 = scmp.ne.s32.totalorder %s101, %s104
      %p110 = scmp.eq.s32.totalorder %s16, 0
      %p111 = por %p109, %p110
      %p112 = scmp.ne.s32.totalorder %s101, %s104
      %p113 = scmp.eq.s32.totalorder %s21, 1
      %p114 = por %p112, %p113
      %p115 = scmp.ne.s32.totalorder %s104, %s105
      %p116 = scmp.eq.s32.totalorder %s21, 0
      %p117 = por %p115, %p116
      %p118 = scmp.ne.s32.totalorder %s104, %s105
      %p119 = scmp.eq.s32.totalorder %s22, 1
      %p120 = por %p118, %p119
      %p122 = scmp.ne.s32.totalorder %s105, %s121
      %p123 = scmp.eq.s32.totalorder %s22, 0
      %p124 = por %p122, %p123
      %s125 = ssub.s32 %s23, %s42
      %s126 = ssub.s32 %s24, %s38
      %s127 = sor.u32 %s125, %s126
      %p128 = scmp.eq.s32.totalorder %s127, 0
      %s130 = sadd.s32 %s129, 1
      %s131 = scalar_select %p128, %s129, %s130
      %p134 = pneg %p128
      %p135 = scmp.eq.s32.totalorder %s16, 1
      %p136 = por %p134, %p135
      %p137 = scmp.ne.s32.totalorder %s129, %s132
      %p138 = scmp.eq.s32.totalorder %s16, 0
      %p139 = por %p137, %p138
      %p140 = scmp.ne.s32.totalorder %s129, %s132
      %p141 = scmp.eq.s32.totalorder %s21, 1
      %p142 = por %p140, %p141
      %p143 = scmp.ne.s32.totalorder %s132, %s133
      %p144 = scmp.eq.s32.totalorder %s21, 0
      %p145 = por %p143, %p144
      %p146 = scmp.ne.s32.totalorder %s132, %s133
      %p147 = scmp.eq.s32.totalorder %s22, 1
      %p148 = por %p146, %p147
      %p150 = scmp.ne.s32.totalorder %s133, %s149
      %p151 = scmp.eq.s32.totalorder %s22, 0
      %p152 = por %p150, %p151
      %p153 = scmp.le.s32.totalorder 1, %s16
      %p154 = scmp.lt.s32.totalorder %s16, 3
      %p155 = pnand %p153, %p154
      %p156 = pneg %p155
      // Predicated region
      $region9: #{tpu_custom_call.1} parent=5 // pred_check
        _
      $region10: #{tpu_custom_call.1} parent=5 // pred_check_branch
        %158 = sbr.rel (%p155) target = $region12
      $region11: #{tpu_custom_call.1} parent=5 // pred_region
        %s159 = ssub.s32 %s16, 1
        // Predicated region
        $region13: #{tpu_custom_call.1} parent=11 // pred_check
          %p160 = pneg %p63
        $region14: #{tpu_custom_call.1} parent=11 // pred_check_branch
          %162 = sbr.rel (%p160) target = $region16
        $region15: #{tpu_custom_call.1} parent=11 // pred_region
          %s163 = smul.u32 8, %s28
          %s165 = ssub.s32 512, 512
          %166 = vsyncadd [#allocation3], %s165
          %s167 = smul.addr %s26, 8
          %s168 = sadd.s32 %s163, %s167
          %s169 = smul.addr %s168, 64
          %s170 = scalar_lea.hbm %s0, %s169
          %s172 = sshll.u32 [#allocation2], 4
          %s173 = int_to_ptr.vmem [resolvable:$true] %s172
          %175 = dma.hbm_to_vmem [thread:$0]  %s170, 512, %s173, [#allocation3]
        $region16: #{tpu_custom_call.1} parent=11 // pred_fallthru
          _
      $region12: #{tpu_custom_call.1} parent=5 // pred_fallthru
        _
      %p176 = scmp.lt.s32.totalorder %s16, 2
      // Predicated region
      $region17: #{tpu_custom_call.1} parent=5 // pred_check
        %p177 = pneg %p176
      $region18: #{tpu_custom_call.1} parent=5 // pred_check_branch
        %179 = sbr.rel (%p177) target = $region20
      $region19: #{tpu_custom_call.1} parent=5 // pred_region
        // Predicated region
        $region21: #{tpu_custom_call.1} parent=19 // pred_check
          %p180 = pneg %p85
        $region22: #{tpu_custom_call.1} parent=19 // pred_check_branch
          %182 = sbr.rel (%p180) target = $region24
        $region23: #{tpu_custom_call.1} parent=19 // pred_region
          %s183 = sand.u32 %s75, 1
          %s184 = scalar_lea.sflag [#allocation6], %s183
          %s185 = sand.u32 %s75, 1
          %s186 = smul.addr %s185, 512
          %s187 = scalar_lea.vmem [#allocation5], %s186
          %s188 = smul.u32 128, %s25
          %s190 = ssub.s32 8192, 8192
          %191 = vsyncadd %s184, %s190
          %s192 = smul.addr %s188, 2
          %s193 = sadd.s32 %s24, %s192
          %s194 = smul.addr %s193, 64
          %s195 = scalar_lea.hbm %s1, %s194
          %s196 = sshll.u32 %s187, 4
          %s197 = int_to_ptr.vmem [resolvable:$true] %s196
          %202 = dma.hbm_to_vmem [thread:$0]  %s195, 8192, %s197, %s184, 128, 64, 4
        $region24: #{tpu_custom_call.1} parent=19 // pred_fallthru
          _
        // Predicated region
        $region25: #{tpu_custom_call.1} parent=19 // pred_check
          %p203 = pneg %p111
        $region26: #{tpu_custom_call.1} parent=19 // pred_check_branch
          %205 = sbr.rel (%p203) target = $region28
        $region27: #{tpu_custom_call.1} parent=19 // pred_region
          %p206 = scmp.lt.s32.totalorder %s24, 1
          %s207 = scalar_select %p206, %s24, 1
          %s208 = scalar_lea.vmem %s2, %s207
        $region28: #{tpu_custom_call.1} parent=19 // pred_fallthru
          _
      $region20: #{tpu_custom_call.1} parent=5 // pred_fallthru
        _
      %p209 = scmp.le.s32.totalorder 1, %s16
      %p210 = scmp.lt.s32.totalorder %s16, 3
      %p211 = pnand %p209, %p210
      %p212 = pneg %p211
      // Predicated region
      $region29: #{tpu_custom_call.1} parent=5 // pred_check
        _
      $region30: #{tpu_custom_call.1} parent=5 // pred_check_branch
        %214 = sbr.rel (%p211) target = $region32
      $region31: #{tpu_custom_call.1} parent=5 // pred_region
        %s215 = ssub.s32 %s16, 1
        // Predicated region
        $region33: #{tpu_custom_call.1} parent=31 // pred_check
          %p216 = pneg %p63
        $region34: #{tpu_custom_call.1} parent=31 // pred_check_branch
          %218 = sbr.rel (%p216) target = $region36
        $region35: #{tpu_custom_call.1} parent=31 // pred_region
          %219 = dma.done [#allocation3], 512
        $region36: #{tpu_custom_call.1} parent=31 // pred_fallthru
          _
        %s220 = sand.u32 %s78, 1
        %s221 = scalar_lea.sflag [#allocation6], %s220
        %s222 = sand.u32 %s78, 1
        %s223 = smul.addr %s222, 512
        %s224 = scalar_lea.vmem [#allocation5], %s223
        // Predicated region
        $region37: #{tpu_custom_call.1} parent=31 // pred_check
          %p225 = pneg %p91
        $region38: #{tpu_custom_call.1} parent=31 // pred_check_branch
          %227 = sbr.rel (%p225) target = $region40
        $region39: #{tpu_custom_call.1} parent=31 // pred_region
          %228 = dma.done %s221, 8192
        $region40: #{tpu_custom_call.1} parent=31 // pred_fallthru
          _
        %p229 = pneg %p63
        %p230 = pneg %p60
        %s231 = sand.u32 %s78, 1
        %s232 = scalar_lea.sflag [#allocation6], %s231
        %s233 = sand.u32 %s78, 1
        %s234 = smul.addr %s233, 512
        %s235 = scalar_lea.vmem [#allocation5], %s234
        %p236 = pneg %p91
        %p237 = pneg %p88
        %p238 = scmp.lt.s32.totalorder %s27, 1
        %s239 = scalar_select %p238, %s27, 1
        %s240 = scalar_lea.vmem %s2, %s239
        %p241 = pneg %p117
        %p242 = pneg %p114
        %p243 = pneg %p145
        %p244 = pneg %p142
        %s245 = sand.u32 %s132, 1
        %s246 = scalar_lea.sflag [#allocation4], %s245
        %s247 = sand.u32 %s132, 1
        %s248 = smul.addr %s247, 8
        %s249 = scalar_lea.vmem [#allocation7], %s248
        %s250 = smul.u32 8, %s28
        %s251 = smul.u32 128, %s28
        %p252 = scmp.lt.s32.totalorder %s27, 1
        %s253 = scalar_select %p252, %s27, 1
        %s254 = scalar_lea.vmem %s2, %s253
        %p256 = scmp.eq.s32.totalorder %s28, 0
        // Predicated region
        $region41: #{tpu_custom_call.1} parent=31 // pred_check
          %p257 = pneg %p256
        $region42: #{tpu_custom_call.1} parent=31 // pred_check_branch
          %259 = sbr.rel (%p257) target = $region44
        $region43: #{tpu_custom_call.1} parent=31 // pred_region
          %260 = vst [vmem:[%s249] sm:$0xff] 0.0
        $region44: #{tpu_custom_call.1} parent=31 // pred_fallthru
          _
        %v261 = vld [vmem:[%s249] sm:$0xff]
        %v262 = vld [vmem:[#allocation2] sm:$0xff]
        %v263 = vld [vmem:[#allocation2 + $0x8] sm:$0xff]
        %v264 = vld [vmem:[#allocation2 + $0x10] sm:$0xff]
        %v265 = vld [vmem:[#allocation2 + $0x18] sm:$0xff]
        %v266 = vld [vmem:[%s224] sm:$0xf]
        %v267 = vld [vmem:[%s224 + $0x4] sm:$0xf]
        %v268 = vld [vmem:[%s224 + $0x8] sm:$0xf]
        %v269 = vld [vmem:[%s224 + $0xc] sm:$0xf]
        %v270 = vld [vmem:[%s224 + $0x10] sm:$0xf]
        %v271 = vld [vmem:[%s224 + $0x14] sm:$0xf]
        %v272 = vld [vmem:[%s224 + $0x18] sm:$0xf]
        %v273 = vld [vmem:[%s224 + $0x1c] sm:$0xf]
        %v274 = vld [vmem:[%s224 + $0x20] sm:$0xf]
        %v275 = vld [vmem:[%s224 + $0x24] sm:$0xf]
        %v276 = vld [vmem:[%s224 + $0x28] sm:$0xf]
        %v277 = vld [vmem:[%s224 + $0x2c] sm:$0xf]
        %v278 = vld [vmem:[%s224 + $0x30] sm:$0xf]
        %v279 = vld [vmem:[%s224 + $0x34] sm:$0xf]
        %v280 = vld [vmem:[%s224 + $0x38] sm:$0xf]
        %v281 = vld [vmem:[%s224 + $0x3c] sm:$0xf]
        %v282 = vld [vmem:[%s224 + $0x40] sm:$0xf]
        %v283 = vld [vmem:[%s224 + $0x44] sm:$0xf]
        %v284 = vld [vmem:[%s224 + $0x48] sm:$0xf]
        %v285 = vld [vmem:[%s224 + $0x4c] sm:$0xf]
        %v286 = vld [vmem:[%s224 + $0x50] sm:$0xf]
        %v287 = vld [vmem:[%s224 + $0x54] sm:$0xf]
        %v288 = vld [vmem:[%s224 + $0x58] sm:$0xf]
        %v289 = vld [vmem:[%s224 + $0x5c] sm:$0xf]
        %v290 = vld [vmem:[%s224 + $0x60] sm:$0xf]
        %v291 = vld [vmem:[%s224 + $0x64] sm:$0xf]
        %v292 = vld [vmem:[%s224 + $0x68] sm:$0xf]
        %v293 = vld [vmem:[%s224 + $0x6c] sm:$0xf]
        %v294 = vld [vmem:[%s224 + $0x70] sm:$0xf]
        %v295 = vld [vmem:[%s224 + $0x74] sm:$0xf]
        %v296 = vld [vmem:[%s224 + $0x78] sm:$0xf]
        %v297 = vld [vmem:[%s224 + $0x7c] sm:$0xf]
        %v298 = vld [vmem:[%s224 + $0x80] sm:$0xf]
        %v299 = vld [vmem:[%s224 + $0x84] sm:$0xf]
        %v300 = vld [vmem:[%s224 + $0x88] sm:$0xf]
        %v301 = vld [vmem:[%s224 + $0x8c] sm:$0xf]
        %v302 = vld [vmem:[%s224 + $0x90] sm:$0xf]
        %v303 = vld [vmem:[%s224 + $0x94] sm:$0xf]
        %v304 = vld [vmem:[%s224 + $0x98] sm:$0xf]
        %v305 = vld [vmem:[%s224 + $0x9c] sm:$0xf]
        %v306 = vld [vmem:[%s224 + $0xa0] sm:$0xf]
        %v307 = vld [vmem:[%s224 + $0xa4] sm:$0xf]
        %v308 = vld [vmem:[%s224 + $0xa8] sm:$0xf]
        %v309 = vld [vmem:[%s224 + $0xac] sm:$0xf]
        %v310 = vld [vmem:[%s224 + $0xb0] sm:$0xf]
        %v311 = vld [vmem:[%s224 + $0xb4] sm:$0xf]
        %v312 = vld [vmem:[%s224 + $0xb8] sm:$0xf]
        %v313 = vld [vmem:[%s224 + $0xbc] sm:$0xf]
        %v314 = vld [vmem:[%s224 + $0xc0] sm:$0xf]
        %v315 = vld [vmem:[%s224 + $0xc4] sm:$0xf]
        %v316 = vld [vmem:[%s224 + $0xc8] sm:$0xf]
        %v317 = vld [vmem:[%s224 + $0xcc] sm:$0xf]
        %v318 = vld [vmem:[%s224 + $0xd0] sm:$0xf]
        %v319 = vld [vmem:[%s224 + $0xd4] sm:$0xf]
        %v320 = vld [vmem:[%s224 + $0xd8] sm:$0xf]
        %v321 = vld [vmem:[%s224 + $0xdc] sm:$0xf]
        %v322 = vld [vmem:[%s224 + $0xe0] sm:$0xf]
        %v323 = vld [vmem:[%s224 + $0xe4] sm:$0xf]
        %v324 = vld [vmem:[%s224 + $0xe8] sm:$0xf]
        %v325 = vld [vmem:[%s224 + $0xec] sm:$0xf]
        %v326 = vld [vmem:[%s224 + $0xf0] sm:$0xf]
        %v327 = vld [vmem:[%s224 + $0xf4] sm:$0xf]
        %v328 = vld [vmem:[%s224 + $0xf8] sm:$0xf]
        %v329 = vld [vmem:[%s224 + $0xfc] sm:$0xf]
        %v330 = vld [vmem:[%s224 + $0x100] sm:$0xf]
        %v331 = vld [vmem:[%s224 + $0x104] sm:$0xf]
        %v332 = vld [vmem:[%s224 + $0x108] sm:$0xf]
        %v333 = vld [vmem:[%s224 + $0x10c] sm:$0xf]
        %v334 = vld [vmem:[%s224 + $0x110] sm:$0xf]
        %v335 = vld [vmem:[%s224 + $0x114] sm:$0xf]
        %v336 = vld [vmem:[%s224 + $0x118] sm:$0xf]
        %v337 = vld [vmem:[%s224 + $0x11c] sm:$0xf]
        %v338 = vld [vmem:[%s224 + $0x120] sm:$0xf]
        %v339 = vld [vmem:[%s224 + $0x124] sm:$0xf]
        %v340 = vld [vmem:[%s224 + $0x128] sm:$0xf]
        %v341 = vld [vmem:[%s224 + $0x12c] sm:$0xf]
        %v342 = vld [vmem:[%s224 + $0x130] sm:$0xf]
        %v343 = vld [vmem:[%s224 + $0x134] sm:$0xf]
        %v344 = vld [vmem:[%s224 + $0x138] sm:$0xf]
        %v345 = vld [vmem:[%s224 + $0x13c] sm:$0xf]
        %v346 = vld [vmem:[%s224 + $0x140] sm:$0xf]
        %v347 = vld [vmem:[%s224 + $0x144] sm:$0xf]
        %v348 = vld [vmem:[%s224 + $0x148] sm:$0xf]
        %v349 = vld [vmem:[%s224 + $0x14c] sm:$0xf]
        %v350 = vld [vmem:[%s224 + $0x150] sm:$0xf]
        %v351 = vld [vmem:[%s224 + $0x154] sm:$0xf]
        %v352 = vld [vmem:[%s224 + $0x158] sm:$0xf]
        %v353 = vld [vmem:[%s224 + $0x15c] sm:$0xf]
        %v354 = vld [vmem:[%s224 + $0x160] sm:$0xf]
        %v355 = vld [vmem:[%s224 + $0x164] sm:$0xf]
        %v356 = vld [vmem:[%s224 + $0x168] sm:$0xf]
        %v357 = vld [vmem:[%s224 + $0x16c] sm:$0xf]
        %v358 = vld [vmem:[%s224 + $0x170] sm:$0xf]
        %v359 = vld [vmem:[%s224 + $0x174] sm:$0xf]
        %v360 = vld [vmem:[%s224 + $0x178] sm:$0xf]
        %v361 = vld [vmem:[%s224 + $0x17c] sm:$0xf]
        %v362 = vld [vmem:[%s224 + $0x180] sm:$0xf]
        %v363 = vld [vmem:[%s224 + $0x184] sm:$0xf]
        %v364 = vld [vmem:[%s224 + $0x188] sm:$0xf]
        %v365 = vld [vmem:[%s224 + $0x18c] sm:$0xf]
        %v366 = vld [vmem:[%s224 + $0x190] sm:$0xf]
        %v367 = vld [vmem:[%s224 + $0x194] sm:$0xf]
        %v368 = vld [vmem:[%s224 + $0x198] sm:$0xf]
        %v369 = vld [vmem:[%s224 + $0x19c] sm:$0xf]
        %v370 = vld [vmem:[%s224 + $0x1a0] sm:$0xf]
        %v371 = vld [vmem:[%s224 + $0x1a4] sm:$0xf]
        %v372 = vld [vmem:[%s224 + $0x1a8] sm:$0xf]
        %v373 = vld [vmem:[%s224 + $0x1ac] sm:$0xf]
        %v374 = vld [vmem:[%s224 + $0x1b0] sm:$0xf]
        %v375 = vld [vmem:[%s224 + $0x1b4] sm:$0xf]
        %v376 = vld [vmem:[%s224 + $0x1b8] sm:$0xf]
        %v377 = vld [vmem:[%s224 + $0x1bc] sm:$0xf]
        %v378 = vld [vmem:[%s224 + $0x1c0] sm:$0xf]
        %v379 = vld [vmem:[%s224 + $0x1c4] sm:$0xf]
        %v380 = vld [vmem:[%s224 + $0x1c8] sm:$0xf]
        %v381 = vld [vmem:[%s224 + $0x1cc] sm:$0xf]
        %v382 = vld [vmem:[%s224 + $0x1d0] sm:$0xf]
        %v383 = vld [vmem:[%s224 + $0x1d4] sm:$0xf]
        %v384 = vld [vmem:[%s224 + $0x1d8] sm:$0xf]
        %v385 = vld [vmem:[%s224 + $0x1dc] sm:$0xf]
        %v386 = vld [vmem:[%s224 + $0x1e0] sm:$0xf]
        %v387 = vld [vmem:[%s224 + $0x1e4] sm:$0xf]
        %v388 = vld [vmem:[%s224 + $0x1e8] sm:$0xf]
        %v389 = vld [vmem:[%s224 + $0x1ec] sm:$0xf]
        %v390 = vld [vmem:[%s224 + $0x1f0] sm:$0xf]
        %v391 = vld [vmem:[%s224 + $0x1f4] sm:$0xf]
        %v392 = vld [vmem:[%s224 + $0x1f8] sm:$0xf]
        %v393 = vld [vmem:[%s224 + $0x1fc] sm:$0xf]
        %v398 = vunpack.c.l.b16 %v262
        %v399 = vunpack.c.h.b16 %v262
        %v400 = vunpack.c.l.b16 %v263
        %v401 = vunpack.c.h.b16 %v263
        %v402 = vunpack.c.l.b16 %v264
        %v403 = vunpack.c.h.b16 %v264
        %v404 = vunpack.c.l.b16 %v265
        %v405 = vunpack.c.h.b16 %v265
        %v406 = vpack.c.b16 %v398, %v398
        %v407 = vpack.c.b16 %v399, %v399
        %v408 = vpack.c.b16 %v400, %v400
        %v409 = vpack.c.b16 %v401, %v401
        %v410 = vpack.c.b16 %v402, %v402
        %v411 = vpack.c.b16 %v403, %v403
        %v412 = vpack.c.b16 %v404, %v404
        %v413 = vpack.c.b16 %v405, %v405
        %v550 = vunpack.c.l.b16 %v266
        %v551 = vunpack.c.l.b16 %v267
        %v552 = vunpack.c.l.b16 %v268
        %v553 = vunpack.c.l.b16 %v269
        %v554 = vunpack.c.l.b16 %v270
        %v555 = vunpack.c.l.b16 %v271
        %v556 = vunpack.c.l.b16 %v272
        %v557 = vunpack.c.l.b16 %v273
        %v558 = vunpack.c.l.b16 %v274
        %v559 = vunpack.c.l.b16 %v275
        %v560 = vunpack.c.l.b16 %v276
        %v561 = vunpack.c.l.b16 %v277
        %v562 = vunpack.c.l.b16 %v278
        %v563 = vunpack.c.l.b16 %v279
        %v564 = vunpack.c.l.b16 %v280
        %v565 = vunpack.c.l.b16 %v281
        %v566 = vunpack.c.l.b16 %v282
        %v567 = vunpack.c.l.b16 %v283
        %v568 = vunpack.c.l.b16 %v284
        %v569 = vunpack.c.l.b16 %v285
        %v570 = vunpack.c.l.b16 %v286
        %v571 = vunpack.c.l.b16 %v287
        %v572 = vunpack.c.l.b16 %v288
        %v573 = vunpack.c.l.b16 %v289
        %v574 = vunpack.c.l.b16 %v290
        %v575 = vunpack.c.l.b16 %v291
        %v576 = vunpack.c.l.b16 %v292
        %v577 = vunpack.c.l.b16 %v293
        %v578 = vunpack.c.l.b16 %v294
        %v579 = vunpack.c.l.b16 %v295
        %v580 = vunpack.c.l.b16 %v296
        %v581 = vunpack.c.l.b16 %v297
        %v582 = vunpack.c.l.b16 %v298
        %v583 = vunpack.c.l.b16 %v299
        %v584 = vunpack.c.l.b16 %v300
        %v585 = vunpack.c.l.b16 %v301
        %v586 = vunpack.c.l.b16 %v302
        %v587 = vunpack.c.l.b16 %v303
        %v588 = vunpack.c.l.b16 %v304
        %v589 = vunpack.c.l.b16 %v305
        %v590 = vunpack.c.l.b16 %v306
        %v591 = vunpack.c.l.b16 %v307
        %v592 = vunpack.c.l.b16 %v308
        %v593 = vunpack.c.l.b16 %v309
        %v594 = vunpack.c.l.b16 %v310
        %v595 = vunpack.c.l.b16 %v311
        %v596 = vunpack.c.l.b16 %v312
        %v597 = vunpack.c.l.b16 %v313
        %v598 = vunpack.c.l.b16 %v314
        %v599 = vunpack.c.l.b16 %v315
        %v600 = vunpack.c.l.b16 %v316
        %v601 = vunpack.c.l.b16 %v317
        %v602 = vunpack.c.l.b16 %v318
        %v603 = vunpack.c.l.b16 %v319
        %v604 = vunpack.c.l.b16 %v320
        %v605 = vunpack.c.l.b16 %v321
        %v606 = vunpack.c.l.b16 %v322
        %v607 = vunpack.c.l.b16 %v323
        %v608 = vunpack.c.l.b16 %v324
        %v609 = vunpack.c.l.b16 %v325
        %v610 = vunpack.c.l.b16 %v326
        %v611 = vunpack.c.l.b16 %v327
        %v612 = vunpack.c.l.b16 %v328
        %v613 = vunpack.c.l.b16 %v329
        %v614 = vunpack.c.l.b16 %v330
        %v615 = vunpack.c.l.b16 %v331
        %v616 = vunpack.c.l.b16 %v332
        %v617 = vunpack.c.l.b16 %v333
        %v618 = vunpack.c.l.b16 %v334
        %v619 = vunpack.c.l.b16 %v335
        %v620 = vunpack.c.l.b16 %v336
        %v621 = vunpack.c.l.b16 %v337
        %v622 = vunpack.c.l.b16 %v338
        %v623 = vunpack.c.l.b16 %v339
        %v624 = vunpack.c.l.b16 %v340
        %v625 = vunpack.c.l.b16 %v341
        %v626 = vunpack.c.l.b16 %v342
        %v627 = vunpack.c.l.b16 %v343
        %v628 = vunpack.c.l.b16 %v344
        %v629 = vunpack.c.l.b16 %v345
        %v630 = vunpack.c.l.b16 %v346
        %v631 = vunpack.c.l.b16 %v347
        %v632 = vunpack.c.l.b16 %v348
        %v633 = vunpack.c.l.b16 %v349
        %v634 = vunpack.c.l.b16 %v350
        %v635 = vunpack.c.l.b16 %v351
        %v636 = vunpack.c.l.b16 %v352
        %v637 = vunpack.c.l.b16 %v353
        %v638 = vunpack.c.l.b16 %v354
        %v639 = vunpack.c.l.b16 %v355
        %v640 = vunpack.c.l.b16 %v356
        %v641 = vunpack.c.l.b16 %v357
        %v642 = vunpack.c.l.b16 %v358
        %v643 = vunpack.c.l.b16 %v359
        %v644 = vunpack.c.l.b16 %v360
        %v645 = vunpack.c.l.b16 %v361
        %v646 = vunpack.c.l.b16 %v362
        %v647 = vunpack.c.l.b16 %v363
        %v648 = vunpack.c.l.b16 %v364
        %v649 = vunpack.c.l.b16 %v365
        %v650 = vunpack.c.l.b16 %v366
        %v651 = vunpack.c.l.b16 %v367
        %v652 = vunpack.c.l.b16 %v368
        %v653 = vunpack.c.l.b16 %v369
        %v654 = vunpack.c.l.b16 %v370
        %v655 = vunpack.c.l.b16 %v371
        %v656 = vunpack.c.l.b16 %v372
        %v657 = vunpack.c.l.b16 %v373
        %v658 = vunpack.c.l.b16 %v374
        %v659 = vunpack.c.l.b16 %v375
        %v660 = vunpack.c.l.b16 %v376
        %v661 = vunpack.c.l.b16 %v377
        %v662 = vunpack.c.l.b16 %v378
        %v663 = vunpack.c.l.b16 %v379
        %v664 = vunpack.c.l.b16 %v380
        %v665 = vunpack.c.l.b16 %v381
        %v666 = vunpack.c.l.b16 %v382
        %v667 = vunpack.c.l.b16 %v383
        %v668 = vunpack.c.l.b16 %v384
        %v669 = vunpack.c.l.b16 %v385
        %v670 = vunpack.c.l.b16 %v386
        %v671 = vunpack.c.l.b16 %v387
        %v672 = vunpack.c.l.b16 %v388
        %v673 = vunpack.c.l.b16 %v389
        %v674 = vunpack.c.l.b16 %v390
        %v675 = vunpack.c.l.b16 %v391
        %v676 = vunpack.c.l.b16 %v392
        %v677 = vunpack.c.l.b16 %v393
        %v678 = vpack.c.b16 %v551, %v550
        %v679 = vpack.c.b16 %v553, %v552
        %v680 = vpack.c.b16 %v555, %v554
        %v681 = vpack.c.b16 %v557, %v556
        %v682 = vpack.c.b16 %v559, %v558
        %v683 = vpack.c.b16 %v561, %v560
        %v684 = vpack.c.b16 %v563, %v562
        %v685 = vpack.c.b16 %v565, %v564
        %v686 = vpack.c.b16 %v567, %v566
        %v687 = vpack.c.b16 %v569, %v568
        %v688 = vpack.c.b16 %v571, %v570
        %v689 = vpack.c.b16 %v573, %v572
        %v690 = vpack.c.b16 %v575, %v574
        %v691 = vpack.c.b16 %v577, %v576
        %v692 = vpack.c.b16 %v579, %v578
        %v693 = vpack.c.b16 %v581, %v580
        %v694 = vpack.c.b16 %v583, %v582
        %v695 = vpack.c.b16 %v585, %v584
        %v696 = vpack.c.b16 %v587, %v586
        %v697 = vpack.c.b16 %v589, %v588
        %v698 = vpack.c.b16 %v591, %v590
        %v699 = vpack.c.b16 %v593, %v592
        %v700 = vpack.c.b16 %v595, %v594
        %v701 = vpack.c.b16 %v597, %v596
        %v702 = vpack.c.b16 %v599, %v598
        %v703 = vpack.c.b16 %v601, %v600
        %v704 = vpack.c.b16 %v603, %v602
        %v705 = vpack.c.b16 %v605, %v604
        %v706 = vpack.c.b16 %v607, %v606
        %v707 = vpack.c.b16 %v609, %v608
        %v708 = vpack.c.b16 %v611, %v610
        %v709 = vpack.c.b16 %v613, %v612
        %v710 = vpack.c.b16 %v615, %v614
        %v711 = vpack.c.b16 %v617, %v616
        %v712 = vpack.c.b16 %v619, %v618
        %v713 = vpack.c.b16 %v621, %v620
        %v714 = vpack.c.b16 %v623, %v622
        %v715 = vpack.c.b16 %v625, %v624
        %v716 = vpack.c.b16 %v627, %v626
        %v717 = vpack.c.b16 %v629, %v628
        %v718 = vpack.c.b16 %v631, %v630
        %v719 = vpack.c.b16 %v633, %v632
        %v720 = vpack.c.b16 %v635, %v634
        %v721 = vpack.c.b16 %v637, %v636
        %v722 = vpack.c.b16 %v639, %v638
        %v723 = vpack.c.b16 %v641, %v640
        %v724 = vpack.c.b16 %v643, %v642
        %v725 = vpack.c.b16 %v645, %v644
        %v726 = vpack.c.b16 %v647, %v646
        %v727 = vpack.c.b16 %v649, %v648
        %v728 = vpack.c.b16 %v651, %v650
        %v729 = vpack.c.b16 %v653, %v652
        %v730 = vpack.c.b16 %v655, %v654
        %v731 = vpack.c.b16 %v657, %v656
        %v732 = vpack.c.b16 %v659, %v658
        %v733 = vpack.c.b16 %v661, %v660
        %v734 = vpack.c.b16 %v663, %v662
        %v735 = vpack.c.b16 %v665, %v664
        %v736 = vpack.c.b16 %v667, %v666
        %v737 = vpack.c.b16 %v669, %v668
        %v738 = vpack.c.b16 %v671, %v670
        %v739 = vpack.c.b16 %v673, %v672
        %v740 = vpack.c.b16 %v675, %v674
        %v741 = vpack.c.b16 %v677, %v676
        %806 = vmatprep.subr.bf16.mxu0 0
        %807 = vmatpush1.bf16.msra.mxu0 %v685
        %808 = vmatprep.subr.bf16.mxu0 0
        %809 = vmatpush1.bf16.msra.mxu0 %v684
        %810 = vmatprep.subr.bf16.mxu0 0
        %811 = vmatpush1.bf16.msra.mxu0 %v683
        %812 = vmatprep.subr.bf16.mxu0 0
        %813 = vmatpush1.bf16.msra.mxu0 %v682
        %814 = vmatprep.subr.bf16.mxu0 0
        %815 = vmatpush1.bf16.msra.mxu0 %v681
        %816 = vmatprep.subr.bf16.mxu0 0
        %817 = vmatpush1.bf16.msra.mxu0 %v680
        %818 = vmatprep.subr.bf16.mxu0 0
        %819 = vmatpush1.bf16.msra.mxu0 %v679
        %820 = vmatprep.subr.bf16.mxu0 0
        %821 = vmatpush1.bf16.msra.mxu0 %v678
        %822 = vmatprep.subr.bf16.mxu0 0
        %823 = vmatpush2.bf16.msra.mxu0 %v693
        %824 = vmatprep.subr.bf16.mxu0 0
        %825 = vmatpush2.bf16.msra.mxu0 %v692
        %826 = vmatprep.subr.bf16.mxu0 0
        %827 = vmatpush2.bf16.msra.mxu0 %v691
        %828 = vmatprep.subr.bf16.mxu0 0
        %829 = vmatpush2.bf16.msra.mxu0 %v690
        %830 = vmatprep.subr.bf16.mxu0 0
        %831 = vmatpush2.bf16.msra.mxu0 %v689
        %832 = vmatprep.subr.bf16.mxu0 0
        %833 = vmatpush2.bf16.msra.mxu0 %v688
        %834 = vmatprep.subr.bf16.mxu0 0
        %835 = vmatpush2.bf16.msra.mxu0 %v687
        %836 = vmatprep.subr.bf16.mxu0 0
        %837 = vmatpush2.bf16.msra.mxu0 %v686
        %838 = vmatprep.mubr.bf16.mxu0 %v407
        %839 = vmatmul.mubr.bf16.gmra.mxu0 %v406
        %v840 = vpop.f32.mrf.mxu0
        %v841 = vadd.f32 0.0, %v840
        %v842 = vpop.f32.mrf.mxu0
        %v843 = vpop.f32.mrf.mxu0
        %v844 = vpop.f32.mrf.mxu0
        %845 = vdwg.mxu0
        %846 = vmatprep.subr.bf16.mxu0 0
        %847 = vmatpush1.bf16.msra.mxu0 %v701
        %848 = vmatprep.subr.bf16.mxu0 0
        %849 = vmatpush1.bf16.msra.mxu0 %v700
        %850 = vmatprep.subr.bf16.mxu0 0
        %851 = vmatpush1.bf16.msra.mxu0 %v699
        %852 = vmatprep.subr.bf16.mxu0 0
        %853 = vmatpush1.bf16.msra.mxu0 %v698
        %854 = vmatprep.subr.bf16.mxu0 0
        %855 = vmatpush1.bf16.msra.mxu0 %v697
        %856 = vmatprep.subr.bf16.mxu0 0
        %857 = vmatpush1.bf16.msra.mxu0 %v696
        %858 = vmatprep.subr.bf16.mxu0 0
        %859 = vmatpush1.bf16.msra.mxu0 %v695
        %860 = vmatprep.subr.bf16.mxu0 0
        %861 = vmatpush1.bf16.msra.mxu0 %v694
        %862 = vmatprep.subr.bf16.mxu0 0
        %863 = vmatpush2.bf16.msra.mxu0 %v709
        %864 = vmatprep.subr.bf16.mxu0 0
        %865 = vmatpush2.bf16.msra.mxu0 %v708
        %866 = vmatprep.subr.bf16.mxu0 0
        %867 = vmatpush2.bf16.msra.mxu0 %v707
        %868 = vmatprep.subr.bf16.mxu0 0
        %869 = vmatpush2.bf16.msra.mxu0 %v706
        %870 = vmatprep.subr.bf16.mxu0 0
        %871 = vmatpush2.bf16.msra.mxu0 %v705
        %872 = vmatprep.subr.bf16.mxu0 0
        %873 = vmatpush2.bf16.msra.mxu0 %v704
        %874 = vmatprep.subr.bf16.mxu0 0
        %875 = vmatpush2.bf16.msra.mxu0 %v703
        %876 = vmatprep.subr.bf16.mxu0 0
        %877 = vmatpush2.bf16.msra.mxu0 %v702
        %878 = vmatprep.mubr.bf16.mxu0 %v409
        %879 = vmatmul.mubr.bf16.gmra.mxu0 %v408
        %v880 = vpop.f32.mrf.mxu0
        %v881 = vadd.f32 %v841, %v880
        %v882 = vpop.f32.mrf.mxu0
        %v883 = vpop.f32.mrf.mxu0
        %v884 = vpop.f32.mrf.mxu0
        %885 = vdwg.mxu0
        %886 = vmatprep.subr.bf16.mxu0 0
        %887 = vmatpush1.bf16.msra.mxu0 %v717
        %888 = vmatprep.subr.bf16.mxu0 0
        %889 = vmatpush1.bf16.msra.mxu0 %v716
        %890 = vmatprep.subr.bf16.mxu0 0
        %891 = vmatpush1.bf16.msra.mxu0 %v715
        %892 = vmatprep.subr.bf16.mxu0 0
        %893 = vmatpush1.bf16.msra.mxu0 %v714
        %894 = vmatprep.subr.bf16.mxu0 0
        %895 = vmatpush1.bf16.msra.mxu0 %v713
        %896 = vmatprep.subr.bf16.mxu0 0
        %897 = vmatpush1.bf16.msra.mxu0 %v712
        %898 = vmatprep.subr.bf16.mxu0 0
        %899 = vmatpush1.bf16.msra.mxu0 %v711
        %900 = vmatprep.subr.bf16.mxu0 0
        %901 = vmatpush1.bf16.msra.mxu0 %v710
        %902 = vmatprep.subr.bf16.mxu0 0
        %903 = vmatpush2.bf16.msra.mxu0 %v725
        %904 = vmatprep.subr.bf16.mxu0 0
        %905 = vmatpush2.bf16.msra.mxu0 %v724
        %906 = vmatprep.subr.bf16.mxu0 0
        %907 = vmatpush2.bf16.msra.mxu0 %v723
        %908 = vmatprep.subr.bf16.mxu0 0
        %909 = vmatpush2.bf16.msra.mxu0 %v722
        %910 = vmatprep.subr.bf16.mxu0 0
        %911 = vmatpush2.bf16.msra.mxu0 %v721
        %912 = vmatprep.subr.bf16.mxu0 0
        %913 = vmatpush2.bf16.msra.mxu0 %v720
        %914 = vmatprep.subr.bf16.mxu0 0
        %915 = vmatpush2.bf16.msra.mxu0 %v719
        %916 = vmatprep.subr.bf16.mxu0 0
        %917 = vmatpush2.bf16.msra.mxu0 %v718
        %918 = vmatprep.mubr.bf16.mxu0 %v411
        %919 = vmatmul.mubr.bf16.gmra.mxu0 %v410
        %v920 = vpop.f32.mrf.mxu0
        %v921 = vadd.f32 %v881, %v920
        %v922 = vpop.f32.mrf.mxu0
        %v923 = vpop.f32.mrf.mxu0
        %v924 = vpop.f32.mrf.mxu0
        %925 = vdwg.mxu0
        %926 = vmatprep.subr.bf16.mxu0 0
        %927 = vmatpush1.bf16.msra.mxu0 %v733
        %928 = vmatprep.subr.bf16.mxu0 0
        %929 = vmatpush1.bf16.msra.mxu0 %v732
        %930 = vmatprep.subr.bf16.mxu0 0
        %931 = vmatpush1.bf16.msra.mxu0 %v731
        %932 = vmatprep.subr.bf16.mxu0 0
        %933 = vmatpush1.bf16.msra.mxu0 %v730
        %934 = vmatprep.subr.bf16.mxu0 0
        %935 = vmatpush1.bf16.msra.mxu0 %v729
        %936 = vmatprep.subr.bf16.mxu0 0
        %937 = vmatpush1.bf16.msra.mxu0 %v728
        %938 = vmatprep.subr.bf16.mxu0 0
        %939 = vmatpush1.bf16.msra.mxu0 %v727
        %940 = vmatprep.subr.bf16.mxu0 0
        %941 = vmatpush1.bf16.msra.mxu0 %v726
        %942 = vmatprep.subr.bf16.mxu0 0
        %943 = vmatpush2.bf16.msra.mxu0 %v741
        %944 = vmatprep.subr.bf16.mxu0 0
        %945 = vmatpush2.bf16.msra.mxu0 %v740
        %946 = vmatprep.subr.bf16.mxu0 0
        %947 = vmatpush2.bf16.msra.mxu0 %v739
        %948 = vmatprep.subr.bf16.mxu0 0
        %949 = vmatpush2.bf16.msra.mxu0 %v738
        %950 = vmatprep.subr.bf16.mxu0 0
        %951 = vmatpush2.bf16.msra.mxu0 %v737
        %952 = vmatprep.subr.bf16.mxu0 0
        %953 = vmatpush2.bf16.msra.mxu0 %v736
        %954 = vmatprep.subr.bf16.mxu0 0
        %955 = vmatpush2.bf16.msra.mxu0 %v735
        %956 = vmatprep.subr.bf16.mxu0 0
        %957 = vmatpush2.bf16.msra.mxu0 %v734
        %958 = vmatprep.mubr.bf16.mxu0 %v413
        %959 = vmatmul.mubr.bf16.gmra.mxu0 %v412
        %v960 = vpop.f32.mrf.mxu0
        %v961 = vadd.f32 %v921, %v960
        %v962 = vpop.f32.mrf.mxu0
        %v963 = vpop.f32.mrf.mxu0
        %v964 = vpop.f32.mrf.mxu0
        %965 = vdwg.mxu0
        %v966 = vadd.f32 %v261, %v961
        %967 = vst [vmem:[%s249] sm:$0xff] %v966
        // Predicated region
        $region45: #{tpu_custom_call.1} parent=31 // pred_check
          %p968 = pneg %p256
        $region46: #{tpu_custom_call.1} parent=31 // pred_check_branch
          %970 = sbr.rel (%p968) target = $region48
        $region47: #{tpu_custom_call.1} parent=31 // pred_region
          %v971 = vld [vmem:[%s249] sm:$0xff]
          %v972 = vld [vmem:[%s254] sm:$0x1]
          %v974 = vlaneseq
          %v975 = vshrl.u32 %v974, 7
          %v976 = vsub.s32 0, %v975
          %v977 = vrot.slane %v972, %v976
          %v979 = vadd.f32 %v971, %v977
          %980 = vst [vmem:[%s249] sm:$0xff] %v979
        $region48: #{tpu_custom_call.1} parent=31 // pred_fallthru
          _
        %s981 = sand.u32 %s132, 1
        %s982 = scalar_lea.sflag [#allocation4], %s981
        %s983 = sand.u32 %s132, 1
        %s984 = smul.addr %s983, 8
        %s985 = scalar_lea.vmem [#allocation7], %s984
        // Predicated region
        $region49: #{tpu_custom_call.1} parent=31 // pred_check
          %p986 = pneg %p142
        $region50: #{tpu_custom_call.1} parent=31 // pred_check_branch
          %988 = sbr.rel (%p986) target = $region52
        $region51: #{tpu_custom_call.1} parent=31 // pred_region
          %s990 = ssub.s32 128, 128
          %991 = vsyncadd %s982, %s990
          %s992 = smul.addr %s26, 2
          %s993 = sadd.s32 %s27, %s992
          %s994 = smul.addr %s993, 128
          %s995 = scalar_lea.hbm %s3, %s994
          %s997 = sshll.u32 %s985, 4
          %s998 = int_to_ptr.vmem [resolvable:$true] %s997
          %1000 = dma.vmem_to_hbm [thread:$0]  %s998, 128, %s995, %s982
        $region52: #{tpu_custom_call.1} parent=31 // pred_fallthru
          _
      $region32: #{tpu_custom_call.1} parent=5 // pred_fallthru
        _
      %p1001 = scmp.le.s32.totalorder 2, %s16
      // Predicated region
      $region53: #{tpu_custom_call.1} parent=5 // pred_check
        %p1002 = pneg %p1001
      $region54: #{tpu_custom_call.1} parent=5 // pred_check_branch
        %1004 = sbr.rel (%p1002) target = $region56
      $region55: #{tpu_custom_call.1} parent=5 // pred_region
        %s1005 = ssub.s32 %s16, 2
        // Predicated region
        $region57: #{tpu_custom_call.1} parent=55 // pred_check
          %p1006 = pneg %p148
        $region58: #{tpu_custom_call.1} parent=55 // pred_check_branch
          %1008 = sbr.rel (%p1006) target = $region60
        $region59: #{tpu_custom_call.1} parent=55 // pred_region
          %s1009 = sand.u32 %s133, 1
          %s1010 = scalar_lea.sflag [#allocation4], %s1009
          %s1011 = sand.u32 %s133, 1
          %s1012 = smul.addr %s1011, 8
          %s1013 = scalar_lea.vmem [#allocation7], %s1012
          %1014 = dma.done %s1010, 128
        $region60: #{tpu_custom_call.1} parent=55 // pred_fallthru
          _
      $region56: #{tpu_custom_call.1} parent=5 // pred_fallthru
        _
    $region6: #{tpu_custom_call.1} parent=1 // loop_footer
      %s20 = sadd.s32 1, %s16
    $region7: #{tpu_custom_call.1} parent=1 // loop_footer_branch
      %15 = sbr.rel target = $region3
    $region8: #{tpu_custom_call.1} parent=1 // loop_exit
      _
    %1015 = vsyncpa [#allocation3], 1
    %s1016 = scalar_lea.sflag [#allocation3], 1
    %1017 = vsyncpa %s1016, 1
    %1018 = vsyncpa [#allocation6], 1
    %s1019 = scalar_lea.sflag [#allocation6], 1
    %1020 = vsyncpa %s1019, 1
    %1021 = vsyncpa [#allocation4], 1
    %s1022 = scalar_lea.sflag [#allocation4], 1
    %1023 = vsyncpa %s1022, 1

</llo_original>
